<compile_context>
chip_gen: v5e
topology: v5e:2x2
jax: 0.10.0
libtpu: 0.0.40
codegen_flags: <defaults>
</compile_context>

<pallas_src>
import functools

import jax
import jax.numpy as jnp
from jax.experimental import pallas as pl
from jax.experimental.pallas import tpu as pltpu


def _round_up(x, m):
    return (x + m - 1) // m * m


def _linear_kernel(x_ref, w_ref, b_ref, o_ref, acc_ref):
    """Computes one (tm, tn) output tile, reducing over the K grid axis.

    x_ref:   (tm, tk)  activation tile
    w_ref:   (tk, tn)  weight tile (stored [in_dim_pad, num_classes_pad])
    b_ref:   (1,  tn)  bias tile (loop-invariant over K)
    o_ref:   (tm, tn)  output tile
    acc_ref: (tm, tn)  f32 VMEM accumulator scratch
    """
    k = pl.program_id(2)

    @pl.when(k == 0)
    def _init():
        acc_ref[...] = jnp.zeros_like(acc_ref)

    # MXU matmul with f32 accumulation.
    acc_ref[...] += jnp.dot(
        x_ref[...], w_ref[...], preferred_element_type=jnp.float32
    )

    # Bias add + cast exactly once, in the finalize branch (not per K step).
    @pl.when(k == pl.num_programs(2) - 1)
    def _finalize():
        o_ref[...] = (acc_ref[...] + b_ref[...]).astype(o_ref.dtype)


def prepare_classifier_params(weight, bias):
    """One-time parameter prep (runs at module-init time, NOT per forward).

    weight: [num_classes, in_dim]  (PyTorch nn.Linear layout)
    bias:   [num_classes]

    Returns:
      w_padded: [in_dim_pad, num_classes_pad]  (transposed once, zero-padded
                so both kernel lane dims are multiples of 128)
      b_padded: [1, num_classes_pad]
    """
    num_classes, in_dim = weight.shape
    k_pad = _round_up(in_dim, 128)
    n_pad = _round_up(num_classes, 128)

    w_t = weight.T  # [in_dim, num_classes] -- happens once, outside hot path
    w_padded = (
        jnp.zeros((k_pad, n_pad), dtype=w_t.dtype)
        .at[:in_dim, :num_classes]
        .set(w_t)
    )
    b_padded = (
        jnp.zeros((1, n_pad), dtype=bias.dtype).at[0, :num_classes].set(bias)
    )
    return w_padded, b_padded


@functools.partial(jax.jit, static_argnames=("num_classes",))
def classifier_forward(features, w_padded, b_padded, num_classes):
    """features: [B, in_dim]; w_padded/b_padded from prepare_classifier_params.
    Returns scores: [B, num_classes]."""
    B, in_dim = features.shape
    k_pad, n_pad = w_padded.shape

    # --- tile selection -----------------------------------------------------
    # M: keep padding small for tiny batches (sublane multiple of 8), cap 128.
    tm = 128 if B >= 128 else _round_up(max(B, 1), 8)
    m_pad = _round_up(B, tm)
    # N / K: lane dims are already multiples of 128; use 256-wide tiles when
    # they divide evenly (MXU-native on v6e/v7x), else 128 (v5e geometry).
    tn = 256 if n_pad % 256 == 0 else 128
    tk = 256 if k_pad % 256 == 0 else 128

    # --- pad activations (zero rows/cols do not change the result) ----------
    x = features
    if (m_pad, k_pad) != (B, in_dim):
        x = (
            jnp.zeros((m_pad, k_pad), dtype=features.dtype)
            .at[:B, :in_dim]
            .set(features)
        )

    grid = (m_pad // tm, n_pad // tn, k_pad // tk)

    out_padded = pl.pallas_call(
        _linear_kernel,
        out_shape=jax.ShapeDtypeStruct((m_pad, n_pad), features.dtype),
        grid_spec=pltpu.PrefetchScalarGridSpec(
            num_scalar_prefetch=0,
            grid=grid,
            in_specs=[
                pl.BlockSpec((tm, tk), lambda i, j, k: (i, k)),
                pl.BlockSpec((tk, tn), lambda i, j, k: (k, j)),
                pl.BlockSpec((1, tn), lambda i, j, k: (0, j)),
            ],
            out_specs=pl.BlockSpec((tm, tn), lambda i, j, k: (i, j)),
            scratch_shapes=[pltpu.VMEM((tm, tn), jnp.float32)],
        ),
        compiler_params=pltpu.CompilerParams(
            dimension_semantics=("parallel", "parallel", "arbitrary"),
        ),
    )(x, w_padded, b_padded)

    return out_padded[:B, :num_classes]


if __name__ == "__main__":
    # Small shapes consistent with the module: batch=8, in_dim=32, num_classes=16.
    B, in_dim, num_classes = 8, 32, 16

    key = jax.random.PRNGKey(0)
    k_x, k_w, k_b = jax.random.split(key, 3)

    features = jax.random.normal(k_x, (B, in_dim), dtype=jnp.float32)
    # Deterministic parameter init (mimics nn.Linear's uniform init bounds).
    bound = 1.0 / jnp.sqrt(in_dim)
    weight = jax.random.uniform(
        k_w, (num_classes, in_dim), minval=-bound, maxval=bound, dtype=jnp.float32
    )
    bias = jax.random.uniform(
        k_b, (num_classes,), minval=-bound, maxval=bound, dtype=jnp.float32
    )

    # One-time parameter prep (transpose + pad happen here, not per call).
    w_padded, b_padded = prepare_classifier_params(weight, bias)

    scores = classifier_forward(features, w_padded, b_padded, num_classes)
    jax.block_until_ready(scores)

    # Correctness check against plain-JAX reference of the PyTorch forward.
    ref = features @ weight.T + bias
    assert scores.shape == (B, num_classes)
    assert jnp.allclose(scores, ref, atol=1e-5, rtol=1e-5)

    print("KERNEL_OK")
</pallas_src>

<mosaic_0001>
module attributes {stable_mosaic.version = 11 : i64} {
  func.func @_linear_kernel(%arg0: i32, %arg1: i32, %arg2: i32, %arg3: memref<8x128xf32, #tpu.memory_space<vmem>>, %arg4: memref<128x128xf32, #tpu.memory_space<vmem>>, %arg5: memref<1x128xf32, #tpu.memory_space<vmem>>, %arg6: memref<8x128xf32, #tpu.memory_space<vmem>>, %arg7: memref<8x128xf32, #tpu.memory_space<vmem>>) attributes {dimension_semantics = [#tpu.dimension_semantics<parallel>, #tpu.dimension_semantics<parallel>, #tpu.dimension_semantics<arbitrary>], iteration_bounds = array<i64: 1, 1, 1>, scalar_prefetch = 0 : i64, scratch_operands = 1 : i64, tpu.core_type = #tpu.core_type<tc>, window_params = [{transform_indices = @transform_0, window_bounds = array<i64: 8, 128>}, {transform_indices = @transform_1, window_bounds = array<i64: 128, 128>}, {transform_indices = @transform_2, window_bounds = array<i64: 1, 128>}, {transform_indices = @transform_3, window_bounds = array<i64: 8, 128>}]} {
    %c0_i32 = arith.constant 0 : i32
    %0 = arith.cmpi eq, %arg2, %c0_i32 : i32
    %1 = arith.extui %0 : i1 to i32
    %c0_i32_0 = arith.constant 0 : i32
    %2 = arith.cmpi ne, %1, %c0_i32_0 : i32
    scf.if %2 {
      %cst_10 = arith.constant 0.000000e+00 : f32
      %12 = vector.broadcast %cst_10 : f32 to vector<8x128xf32>
      %c0_11 = arith.constant 0 : index
      %c0_12 = arith.constant 0 : index
      %13 = vector.load %arg7[%c0_11, %c0_12] : memref<8x128xf32, #tpu.memory_space<vmem>>, vector<8x128xf32>
      tpu.vector_store %arg7[%c0_11, %c0_12], %12 {strides = array<i32>} : memref<8x128xf32, #tpu.memory_space<vmem>>, vector<8x128xf32>,
    } else {
    }
    %c0 = arith.constant 0 : index
    %c0_1 = arith.constant 0 : index
    %3 = vector.load %arg7[%c0, %c0_1] : memref<8x128xf32, #tpu.memory_space<vmem>>, vector<8x128xf32>
    %c0_2 = arith.constant 0 : index
    %c0_3 = arith.constant 0 : index
    %4 = vector.load %arg3[%c0_2, %c0_3] : memref<8x128xf32, #tpu.memory_space<vmem>>, vector<8x128xf32>
    %c0_4 = arith.constant 0 : index
    %c0_5 = arith.constant 0 : index
    %5 = vector.load %arg4[%c0_4, %c0_5] : memref<128x128xf32, #tpu.memory_space<vmem>>, vector<128x128xf32>
    %cst = arith.constant dense<0.000000e+00> : vector<8x128xf32>
    %6 = tpu.matmul %4, %5, %cst {dimension_numbers = #tpu.dot_dimension_numbers<[1], [0], [0], [1], [0, 0, 1, 1], [], []>} : vector<8x128xf32>, vector<128x128xf32>, vector<8x128xf32> -> vector<8x128xf32>
    %7 = arith.addf %3, %6 : vector<8x128xf32>
    %c0_6 = arith.constant 0 : index
    %c0_7 = arith.constant 0 : index
    %8 = vector.load %arg7[%c0_6, %c0_7] : memref<8x128xf32, #tpu.memory_space<vmem>>, vector<8x128xf32>
    tpu.vector_store %arg7[%c0_6, %c0_7], %7 {strides = array<i32>} : memref<8x128xf32, #tpu.memory_space<vmem>>, vector<8x128xf32>,
    %c0_i32_8 = arith.constant 0 : i32
    %9 = arith.cmpi eq, %arg2, %c0_i32_8 : i32
    %10 = arith.extui %9 : i1 to i32
    %c0_i32_9 = arith.constant 0 : i32
    %11 = arith.cmpi ne, %10, %c0_i32_9 : i32
    scf.if %11 {
      %c0_10 = arith.constant 0 : index
      %c0_11 = arith.constant 0 : index
      %12 = vector.load %arg7[%c0_10, %c0_11] : memref<8x128xf32, #tpu.memory_space<vmem>>, vector<8x128xf32>
      %c0_12 = arith.constant 0 : index
      %c0_13 = arith.constant 0 : index
      %13 = vector.load %arg5[%c0_12, %c0_13] : memref<1x128xf32, #tpu.memory_space<vmem>>, vector<1x128xf32>
      %14 = vector.broadcast %13 : vector<1x128xf32> to vector<8x128xf32>
      %15 = arith.addf %12, %14 : vector<8x128xf32>
      %c0_14 = arith.constant 0 : index
      %c0_15 = arith.constant 0 : index
      %16 = vector.load %arg6[%c0_14, %c0_15] : memref<8x128xf32, #tpu.memory_space<vmem>>, vector<8x128xf32>
      tpu.vector_store %arg6[%c0_14, %c0_15], %15 {strides = array<i32>} : memref<8x128xf32, #tpu.memory_space<vmem>>, vector<8x128xf32>,
    } else {
    }
    return
  }
  func.func @transform_0(%arg0: i32, %arg1: i32, %arg2: i32) -> (i32, i32) {
    %c0_i32 = arith.constant 0 : i32
    return %arg0, %arg2 : i32, i32
  }
  func.func @transform_1(%arg0: i32, %arg1: i32, %arg2: i32) -> (i32, i32) {
    %c0_i32 = arith.constant 0 : i32
    return %arg2, %arg1 : i32, i32
  }
  func.func @transform_2(%arg0: i32, %arg1: i32, %arg2: i32) -> (i32, i32) {
    %c0_i32 = arith.constant 0 : i32
    %c0_i32_0 = arith.constant 0 : i32
    return %c0_i32, %arg1 : i32, i32
  }
  func.func @transform_3(%arg0: i32, %arg1: i32, %arg2: i32) -> (i32, i32) {
    %c0_i32 = arith.constant 0 : i32
    return %arg0, %arg1 : i32, i32
  }
}

</mosaic_0001>

<llo_original>
// kernel: classifier_forward.1
$region0: #{classifier_forward.1}
  #allocation0 [shape = 'u32[]', space=smem, size = 0x4, offset = 0x4, fixed_abs, tag = 'smem constant byte address 0x4 - core index']
  #allocation1 [shape = 'u32[72,128]{1,0:T(1,128)}', space=vmem, size = 0x9000, scoped, tag = 'internal scratch']
  #allocation2 [shape = 'f32[8,128]{1,0:T(8,128)}', space=vmem, size = 0x1000, scoped, tag = 'scratch operand']
  %s0 = inlined_call_operand.vmem [shape: f32[8,128], index: 0, kind: input, shape index: {}]
  %s1 = inlined_call_operand.hbm [shape: f32[128,128], index: 1, kind: input, shape index: {}]
  %s2 = inlined_call_operand.vmem [shape: f32[1,128], index: 2, kind: input, shape index: {}]
  %s3 = inlined_call_operand.hbm [shape: f32[8,128], index: 3, kind: output, shape index: {}]
  %s4 = sld [smem:[#allocation0]]
  $region34: #{classifier_forward.1} parent=0
    _
  %s6 = ssub.s32 1, %s4
  %s7 = scalar_select 0, %s6, %s4
  $region1: #{classifier_forward.1} parent=0
    #allocation3 [shape = 'u8[65536]{0}', space=vmem, size = 0x10000, scoped, tag = 'input window, operand 1, single buffered']
    #allocation4 [shape = 's32[1]{0}', space=sflag, size = 0x4, scoped, tag = 'scoped memory for classifier_forward.1']
    #allocation5 [shape = 's32[1]{0}', space=sflag, size = 0x4, scoped, tag = 'scoped memory for classifier_forward.1']
    #allocation6 [shape = 'u8[4096]{0}', space=vmem, size = 0x1000, scoped, tag = 'output window, operand 0, single buffered']
    %8 = vsyncpa [#allocation4], 0
    %9 = vsyncpa [#allocation5], 0
    // Predicated region
    $region2: #{classifier_forward.1} parent=1 // pred_check
      _
    $region3: #{classifier_forward.1} parent=1 // pred_check_branch
      %11 = sbr.rel (0) target = $region5
    $region4: #{classifier_forward.1} parent=1 // pred_region
      _
    $region5: #{classifier_forward.1} parent=1 // pred_fallthru
      _
    // Predicated region
    $region6: #{classifier_forward.1} parent=1 // pred_check
      _
    $region7: #{classifier_forward.1} parent=1 // pred_check_branch
      %13 = sbr.rel (0) target = $region9
    $region8: #{classifier_forward.1} parent=1 // pred_region
      %15 = vsyncadd [#allocation4], 0
      %s16 = sshll.u32 %s1, 4
      %s17 = int_to_ptr.hbm [resolvable:$true] %s16
      %s18 = sshll.u32 [#allocation3], 4
      %s19 = int_to_ptr.vmem [resolvable:$true] %s18
      %24 = dma.hbm_to_vmem [thread:$0]  %s17, 2048, %s19, [#allocation4], 128, 128, 8
    $region9: #{classifier_forward.1} parent=1 // pred_fallthru
      _
    // Predicated region
    $region10: #{classifier_forward.1} parent=1 // pred_check
      _
    $region11: #{classifier_forward.1} parent=1 // pred_check_branch
      %26 = sbr.rel (0) target = $region13
    $region12: #{classifier_forward.1} parent=1 // pred_region
      _
    $region13: #{classifier_forward.1} parent=1 // pred_fallthru
      _
    // Predicated region
    $region14: #{classifier_forward.1} parent=1 // pred_check
      _
    $region15: #{classifier_forward.1} parent=1 // pred_check_branch
      %28 = sbr.rel (0) target = $region17
    $region16: #{classifier_forward.1} parent=1 // pred_region
      %30 = dma.done [#allocation4], 2048
    $region17: #{classifier_forward.1} parent=1 // pred_fallthru
      _
    %p31 = scmp.eq.s32.totalorder 0, 0
    // Predicated region
    $region18: #{classifier_forward.1} parent=1 // pred_check
      %p32 = pneg %p31
    $region19: #{classifier_forward.1} parent=1 // pred_check_branch
      %34 = sbr.rel (%p32) target = $region21
    $region20: #{classifier_forward.1} parent=1 // pred_region
      %35 = vst [vmem:[#allocation2] sm:$0xff] 0.0
    $region21: #{classifier_forward.1} parent=1 // pred_fallthru
      _
    %v36 = vld [vmem:[#allocation2] sm:$0xff]
    %v37 = vld [vmem:[%s0] sm:$0xff]
    %v38 = vld [vmem:[#allocation3] sm:$0xff]
    %v39 = vld [vmem:[#allocation3 + $0x8] sm:$0xff]
    %v40 = vld [vmem:[#allocation3 + $0x10] sm:$0xff]
    %v41 = vld [vmem:[#allocation3 + $0x18] sm:$0xff]
    %v42 = vld [vmem:[#allocation3 + $0x20] sm:$0xff]
    %v43 = vld [vmem:[#allocation3 + $0x28] sm:$0xff]
    %v44 = vld [vmem:[#allocation3 + $0x30] sm:$0xff]
    %v45 = vld [vmem:[#allocation3 + $0x38] sm:$0xff]
    %v46 = vld [vmem:[#allocation3 + $0x40] sm:$0xff]
    %v47 = vld [vmem:[#allocation3 + $0x48] sm:$0xff]
    %v48 = vld [vmem:[#allocation3 + $0x50] sm:$0xff]
    %v49 = vld [vmem:[#allocation3 + $0x58] sm:$0xff]
    %v50 = vld [vmem:[#allocation3 + $0x60] sm:$0xff]
    %v51 = vld [vmem:[#allocation3 + $0x68] sm:$0xff]
    %v52 = vld [vmem:[#allocation3 + $0x70] sm:$0xff]
    %v53 = vld [vmem:[#allocation3 + $0x78] sm:$0xff]
    %54 = vmatpush.msra.mxu0 %v53
    %55 = vmatpush.msra.mxu0 %v52
    %56 = vmatpush.msra.mxu0 %v51
    %57 = vmatpush.msra.mxu0 %v50
    %58 = vmatpush.msra.mxu0 %v49
    %59 = vmatpush.msra.mxu0 %v48
    %60 = vmatpush.msra.mxu0 %v47
    %61 = vmatpush.msra.mxu0 %v46
    %62 = vmatpush.msra.mxu0 %v45
    %63 = vmatpush.msra.mxu0 %v44
    %64 = vmatpush.msra.mxu0 %v43
    %65 = vmatpush.msra.mxu0 %v42
    %66 = vmatpush.msra.mxu0 %v41
    %67 = vmatpush.msra.mxu0 %v40
    %68 = vmatpush.msra.mxu0 %v39
    %69 = vmatpush.msra.mxu0 %v38
    %70 = vmatmul.f32.gmra.mxu0 %v37
    %v71 = vpop.f32.mrf.mxu0
    %v72 = vadd.f32 0.0, %v71
    %73 = vdwg.mxu0
    %v74 = vadd.f32 %v36, %v72
    %75 = vst [vmem:[#allocation2] sm:$0xff] %v74
    // Predicated region
    $region22: #{classifier_forward.1} parent=1 // pred_check
      %p76 = pneg %p31
    $region23: #{classifier_forward.1} parent=1 // pred_check_branch
      %78 = sbr.rel (%p76) target = $region25
    $region24: #{classifier_forward.1} parent=1 // pred_region
      %v79 = vld [vmem:[#allocation2] sm:$0xff]
      %v80 = vld [vmem:[%s2] sm:$0x1]
      %v82 = vperm.slane %v80, 0
      %v84 = vadd.f32 %v79, %v82
      %85 = vst [vmem:[#allocation6] sm:$0xff] %v84
    $region25: #{classifier_forward.1} parent=1 // pred_fallthru
      _
    // Predicated region
    $region26: #{classifier_forward.1} parent=1 // pred_check
      _
    $region27: #{classifier_forward.1} parent=1 // pred_check_branch
      %87 = sbr.rel (0) target = $region29
    $region28: #{classifier_forward.1} parent=1 // pred_region
      %89 = vsyncadd [#allocation5], 0
      %s91 = sshll.u32 [#allocation6], 4
      %s92 = int_to_ptr.vmem [resolvable:$true] %s91
      %s93 = sshll.u32 %s3, 4
      %s94 = int_to_ptr.hbm [resolvable:$true] %s93
      %96 = dma.vmem_to_hbm [thread:$0]  %s92, 128, %s94, [#allocation5]
    $region29: #{classifier_forward.1} parent=1 // pred_fallthru
      _
    // Predicated region
    $region30: #{classifier_forward.1} parent=1 // pred_check
      _
    $region31: #{classifier_forward.1} parent=1 // pred_check_branch
      %98 = sbr.rel (0) target = $region33
    $region32: #{classifier_forward.1} parent=1 // pred_region
      %100 = dma.done [#allocation5], 128
    $region33: #{classifier_forward.1} parent=1 // pred_fallthru
      _
    %101 = vsyncpa [#allocation4], 1
    %102 = vsyncpa [#allocation5], 1

</llo_original>
